<compile_context>
chip_gen: v7x
topology: tpu7x:2x2x1
jax: 0.10.0
libtpu: 0.0.40
codegen_flags: <defaults>
</compile_context>

<pallas_src>
import functools
import math

import jax
import jax.numpy as jnp
from jax.experimental import pallas as pl
from jax.experimental.pallas import tpu as pltpu

STD_COLOR = 0.05
STD_COLOR_2 = STD_COLOR ** 2

LANES = 128
SUBLANES = 8


def _round_up(x, m):
    return (x + m - 1) // m * m


def _sublane_multiple(dtype):
    # Packed sub-32-bit dtypes tile 16 (bf16) / 32 (int8, fp8) rows per vreg.
    itemsize = jnp.dtype(dtype).itemsize
    return max(SUBLANES, 32 // max(itemsize, 1))


def _hw_config():
    """Returns (num_partials, max_block_rows, vmem_limit_bytes, dim_semantics)."""
    kind = ""
    try:
        kind = jax.devices()[0].device_kind.lower()
    except Exception:  # be conservative if the query fails
        pass
    if "v7" in kind:
        # 2 TensorCores / chip: shard the stream across them with a leading
        # CORE_PARALLEL axis.  16384-row blocks = 8 MiB/input/block; with the
        # vreg-sized accumulator the double-buffered footprint is ~32 MiB, so
        # bump the scoped-VMEM limit (64 MiB physical per TC on v7x).
        leading = getattr(pltpu, "CORE_PARALLEL", None)
        trailing = getattr(pltpu, "ARBITRARY", None)
        if leading is None or trailing is None:
            leading, trailing = "parallel", "arbitrary"
        return 2, 16384, 48 << 20, (leading, trailing)
    if "v6" in kind:
        # Single TC.  8192-row blocks = 4 MiB/input/block -> ~16 MiB double
        # buffered + tiny acc, fits the 32 MiB default scoped VMEM.
        return 1, 8192, None, ("arbitrary", "arbitrary")
    # v5e (16 MiB default scoped VMEM) and anything unknown: 4096-row blocks
    # = 2 MiB/input/block -> ~8 MiB double buffered.
    return 1, 4096, None, ("arbitrary", "arbitrary")


def _recon_loss_kernel(recon_ref, target_ref, out_ref, acc_ref, *,
                       rows, block_rows, tiles_per_partial, num_tiles,
                       need_mask):
    """Accumulate sum((target - recon)^2) per partial.

    recon_ref / target_ref: (block_rows, LANES) tiles in VMEM (native dtype)
    out_ref:                (1, 8, 128) f32 per-partial partial-sum block
    acc_ref:                (8, 128) f32 vreg-shaped VMEM accumulator
    """
    p = pl.program_id(0)   # partial (sharded across TCs on v7x)
    j = pl.program_id(1)   # tile within partial (sequential reduction axis)

    @pl.when(j == 0)
    def _():
        acc_ref[...] = jnp.zeros_like(acc_ref)

    # Cast per-tile inside the kernel (VPU work hidden under DMA).
    r = recon_ref[...].astype(jnp.float32)
    t = target_ref[...].astype(jnp.float32)
    d = t - r
    sq = d * d

    def reduce_to_vreg(x):
        # (block_rows, 128) -> (8, 128): layout-preserving reshape along the
        # sublane-tile boundary + pure-VALU reduce over the leading dim.
        return x.reshape(block_rows // SUBLANES, SUBLANES, LANES).sum(axis=0)

    if need_mask:
        tile_idx = p * tiles_per_partial + j
        is_edge = tile_idx >= num_tiles - 1   # overhanging last tile or dummy step

        @pl.when(is_edge)
        def _():
            row_base = tile_idx * block_rows
            row_ids = row_base + jax.lax.broadcasted_iota(jnp.int32, sq.shape, 0)
            acc_ref[...] += reduce_to_vreg(jnp.where(row_ids < rows, sq, 0.0))

        @pl.when(jnp.logical_not(is_edge))
        def _():
            acc_ref[...] += reduce_to_vreg(sq)
    else:
        acc_ref[...] += reduce_to_vreg(sq)

    @pl.when(j == pl.num_programs(1) - 1)
    def _():
        out_ref[...] = acc_ref[...].reshape(out_ref.shape)


@jax.jit
def loss_reconstruction(reconImg, aefe_input):
    """Equivalent of the PyTorch module's forward pass. Returns a scalar f32."""
    recon = reconImg.reshape(-1)
    target = aefe_input.reshape(-1)
    n = recon.shape[0]

    num_partials, max_block_rows, vmem_limit, dim_semantics = _hw_config()

    # Pad only to a lane multiple, and only if needed (no-op for typical image
    # sizes).  Zero padding contributes zero to the sum of squares.
    n_lane = _round_up(n, LANES)
    if n_lane != n:
        recon = jnp.pad(recon, (0, n_lane - n))
        target = jnp.pad(target, (0, n_lane - n))
    rows = n_lane // LANES
    recon2d = recon.reshape(rows, LANES)
    target2d = target.reshape(rows, LANES)

    sub_mult = max(_sublane_multiple(recon2d.dtype),
                   _sublane_multiple(target2d.dtype))
    block_rows = min(max_block_rows, _round_up(rows, sub_mult))
    num_tiles = pl.cdiv(rows, block_rows)
    tiles_per_partial = pl.cdiv(num_tiles, num_partials)

    # Compile a mask-free kernel when the shapes divide exactly; otherwise only
    # the edge/dummy tiles pay for the iota+compare+where (gated in-kernel).
    need_mask = (rows % block_rows != 0) or (num_tiles % num_partials != 0)

    def tile_index(p, j):
        # Clamp so padded grid steps still point at a valid block (their
        # contribution is masked to zero inside the kernel).
        t = p * tiles_per_partial + j
        return (jnp.minimum(t, num_tiles - 1), 0)

    kernel = functools.partial(
        _recon_loss_kernel,
        rows=rows,
        block_rows=block_rows,
        tiles_per_partial=tiles_per_partial,
        num_tiles=num_tiles,
        need_mask=need_mask,
    )

    cp_kwargs = dict(dimension_semantics=dim_semantics)
    if vmem_limit is not None:
        cp_kwargs["vmem_limit_bytes"] = vmem_limit

    bytes_accessed = (recon2d.size * recon2d.dtype.itemsize
                      + target2d.size * target2d.dtype.itemsize
                      + num_partials * SUBLANES * LANES * 4)

    partials = pl.pallas_call(
        kernel,
        out_shape=jax.ShapeDtypeStruct((num_partials, SUBLANES, LANES),
                                       jnp.float32),
        grid_spec=pltpu.PrefetchScalarGridSpec(
            num_scalar_prefetch=0,
            grid=(num_partials, tiles_per_partial),
            in_specs=[
                pl.BlockSpec((block_rows, LANES), tile_index),
                pl.BlockSpec((block_rows, LANES), tile_index),
            ],
            out_specs=pl.BlockSpec((1, SUBLANES, LANES), lambda p, j: (p, 0, 0)),
            scratch_shapes=[pltpu.VMEM((SUBLANES, LANES), jnp.float32)],
        ),
        compiler_params=pltpu.CompilerParams(**cp_kwargs),
        cost_estimate=pl.CostEstimate(
            flops=3 * n, transcendentals=0, bytes_accessed=bytes_accessed),
    )(recon2d, target2d)

    # Combine per-core / per-position partial sums and apply scale + constant.
    sum_sq = jnp.sum(partials)
    return sum_sq / jnp.float32(STD_COLOR_2) + jnp.float32(
        math.log(2.0 * math.pi * STD_COLOR_2))


if __name__ == "__main__":
    key = jax.random.PRNGKey(0)
    k1, k2 = jax.random.split(key)
    # Small NCHW shapes consistent with an image-reconstruction loss.
    recon_img = jax.random.normal(k1, (2, 4, 16, 16), dtype=jnp.float32)
    aefe_input = jax.random.normal(k2, (2, 4, 16, 16), dtype=jnp.float32)

    loss = loss_reconstruction(recon_img, aefe_input)
    jax.block_until_ready(loss)

    # Pure-JAX reference check.
    ref = jnp.sum((aefe_input - recon_img) ** 2 / STD_COLOR_2) + jnp.log(
        jnp.float32(2 * math.pi * STD_COLOR_2))
    assert jnp.allclose(loss, ref, rtol=1e-5, atol=1e-3), (loss, ref)

    print("KERNEL_OK")
</pallas_src>

<mosaic_0001>
module attributes {stable_mosaic.version = 11 : i64} {
  func.func @_recon_loss_kernel(%arg0: i32, %arg1: i32, %arg2: memref<16x128xf32, #tpu.memory_space<vmem>>, %arg3: memref<16x128xf32, #tpu.memory_space<vmem>>, %arg4: memref<1x8x128xf32, #tpu.memory_space<vmem>>, %arg5: memref<8x128xf32, #tpu.memory_space<vmem>>) attributes {dimension_semantics = [#tpu.dimension_semantics<arbitrary>, #tpu.dimension_semantics<arbitrary>], iteration_bounds = array<i64: 1, 1>, scalar_prefetch = 0 : i64, scratch_operands = 1 : i64, tpu.core_type = #tpu.core_type<tc>, window_params = [{transform_indices = @transform_0, window_bounds = array<i64: 16, 128>}, {transform_indices = @transform_1, window_bounds = array<i64: 16, 128>}, {transform_indices = @transform_2, window_bounds = array<i64: 1, 8, 128>}]} {
    %c0_i32 = arith.constant 0 : i32
    %0 = arith.cmpi eq, %arg1, %c0_i32 : i32
    %1 = arith.extui %0 : i1 to i32
    %c0_i32_0 = arith.constant 0 : i32
    %2 = arith.cmpi ne, %1, %c0_i32_0 : i32
    scf.if %2 {
      %cst_10 = arith.constant 0.000000e+00 : f32
      %15 = vector.broadcast %cst_10 : f32 to vector<8x128xf32>
      %c0_11 = arith.constant 0 : index
      %c0_12 = arith.constant 0 : index
      %16 = vector.load %arg5[%c0_11, %c0_12] : memref<8x128xf32, #tpu.memory_space<vmem>>, vector<8x128xf32>
      tpu.vector_store %arg5[%c0_11, %c0_12], %15 {strides = array<i32>} : memref<8x128xf32, #tpu.memory_space<vmem>>, vector<8x128xf32>,
    } else {
    }
    %c0 = arith.constant 0 : index
    %c0_1 = arith.constant 0 : index
    %3 = vector.load %arg2[%c0, %c0_1] : memref<16x128xf32, #tpu.memory_space<vmem>>, vector<16x128xf32>
    %c0_2 = arith.constant 0 : index
    %c0_3 = arith.constant 0 : index
    %4 = vector.load %arg3[%c0_2, %c0_3] : memref<16x128xf32, #tpu.memory_space<vmem>>, vector<16x128xf32>
    %5 = arith.subf %4, %3 : vector<16x128xf32>
    %6 = arith.mulf %5, %5 : vector<16x128xf32>
    %c0_4 = arith.constant 0 : index
    %c0_5 = arith.constant 0 : index
    %7 = vector.load %arg5[%c0_4, %c0_5] : memref<8x128xf32, #tpu.memory_space<vmem>>, vector<8x128xf32>
    %8 = vector.shape_cast %6 : vector<16x128xf32> to vector<2x8x128xf32>
    %cst = arith.constant dense<0.000000e+00> : vector<8x128xf32>
    %9 = vector.multi_reduction <add>, %8, %cst [0] : vector<2x8x128xf32> to vector<8x128xf32>
    %10 = arith.addf %7, %9 : vector<8x128xf32>
    %c0_6 = arith.constant 0 : index
    %c0_7 = arith.constant 0 : index
    %11 = vector.load %arg5[%c0_6, %c0_7] : memref<8x128xf32, #tpu.memory_space<vmem>>, vector<8x128xf32>
    tpu.vector_store %arg5[%c0_6, %c0_7], %10 {strides = array<i32>} : memref<8x128xf32, #tpu.memory_space<vmem>>, vector<8x128xf32>,
    %c0_i32_8 = arith.constant 0 : i32
    %12 = arith.cmpi eq, %arg1, %c0_i32_8 : i32
    %13 = arith.extui %12 : i1 to i32
    %c0_i32_9 = arith.constant 0 : i32
    %14 = arith.cmpi ne, %13, %c0_i32_9 : i32
    scf.if %14 {
      %c0_10 = arith.constant 0 : index
      %c0_11 = arith.constant 0 : index
      %15 = vector.load %arg5[%c0_10, %c0_11] : memref<8x128xf32, #tpu.memory_space<vmem>>, vector<8x128xf32>
      %16 = vector.shape_cast %15 : vector<8x128xf32> to vector<1x8x128xf32>
      %c0_12 = arith.constant 0 : index
      %c0_13 = arith.constant 0 : index
      %c0_14 = arith.constant 0 : index
      %17 = vector.load %arg4[%c0_12, %c0_13, %c0_14] : memref<1x8x128xf32, #tpu.memory_space<vmem>>, vector<1x8x128xf32>
      tpu.vector_store %arg4[%c0_12, %c0_13, %c0_14], %16 {strides = array<i32>} : memref<1x8x128xf32, #tpu.memory_space<vmem>>, vector<1x8x128xf32>,
    } else {
    }
    return
  }
  func.func @transform_0(%arg0: i32, %arg1: i32) -> (i32, i32) {
    %c1_i32 = arith.constant 1 : i32
    %0 = arith.muli %arg0, %c1_i32 : i32
    %1 = arith.addi %0, %arg1 : i32
    %c0_i32 = arith.constant 0 : i32
    %2 = arith.minsi %1, %c0_i32 : i32
    %c0_i32_0 = arith.constant 0 : i32
    %c0_i32_1 = arith.constant 0 : i32
    return %2, %c0_i32_0 : i32, i32
  }
  func.func @transform_1(%arg0: i32, %arg1: i32) -> (i32, i32) {
    %c1_i32 = arith.constant 1 : i32
    %0 = arith.muli %arg0, %c1_i32 : i32
    %1 = arith.addi %0, %arg1 : i32
    %c0_i32 = arith.constant 0 : i32
    %2 = arith.minsi %1, %c0_i32 : i32
    %c0_i32_0 = arith.constant 0 : i32
    %c0_i32_1 = arith.constant 0 : i32
    return %2, %c0_i32_0 : i32, i32
  }
  func.func @transform_2(%arg0: i32, %arg1: i32) -> (i32, i32, i32) {
    %c0_i32 = arith.constant 0 : i32
    %c0_i32_0 = arith.constant 0 : i32
    %c0_i32_1 = arith.constant 0 : i32
    return %arg0, %c0_i32, %c0_i32_0 : i32, i32, i32
  }
}

</mosaic_0001>

<llo_original>
// kernel: loss_reconstruction.1
$region0: #{loss_reconstruction.1}
  #allocation0 [shape = 'u32[]', space=smem, size = 0x4, offset = 0x4, fixed_abs, tag = 'smem constant byte address 0x4 - core index']
  #allocation1 [shape = 'u32[144,128]{1,0:T(1,128)}', space=vmem, size = 0x12000, scoped, tag = 'internal scratch']
  #allocation2 [shape = 'f32[8,128]{1,0:T(8,128)}', space=vmem, size = 0x1000, scoped, tag = 'scratch operand']
  %s0 = inlined_call_operand.vmem [shape: f32[16,128], index: 0, kind: input, shape index: {}]
  %s1 = inlined_call_operand.vmem [shape: f32[16,128], index: 1, kind: input, shape index: {}]
  %s2 = inlined_call_operand.vmem [shape: f32[1,8,128], index: 2, kind: output, shape index: {}]
  %s3 = sld [smem:[#allocation0]]
  $region26: #{loss_reconstruction.1} parent=0
    _
  %s5 = ssub.s32 1, %s3
  %s6 = scalar_select 0, %s5, %s3
  // Predicated region
  $region2: #{loss_reconstruction.1} parent=0 // pred_check
    _
  $region3: #{loss_reconstruction.1} parent=0 // pred_check_branch
    %8 = sbr.rel (0) target = $region5
  $region4: #{loss_reconstruction.1} parent=0 // pred_region
    %s9 = sadd.s32 0, 0
    %p10 = scmp.lt.s32.totalorder %s9, 0
    %s11 = scalar_select %p10, %s9, 0
    %s12 = smul.u32 2, %s11
    %p13 = scmp.lt.s32.totalorder %s12, 1
    %s14 = scalar_select %p13, %s12, 1
    %s15 = smul.addr %s14, 8
    %s16 = scalar_lea.vmem %s0, %s15
    %s17 = sadd.s32 0, 0
    %p18 = scmp.lt.s32.totalorder %s17, 0
    %s19 = scalar_select %p18, %s17, 0
    %s20 = smul.u32 2, %s19
  $region5: #{loss_reconstruction.1} parent=0 // pred_fallthru
    _
  // Predicated region
  $region6: #{loss_reconstruction.1} parent=0 // pred_check
    _
  $region7: #{loss_reconstruction.1} parent=0 // pred_check_branch
    %22 = sbr.rel (0) target = $region9
  $region8: #{loss_reconstruction.1} parent=0 // pred_region
    %s23 = sadd.s32 0, 0
    %p24 = scmp.lt.s32.totalorder %s23, 0
    %s25 = scalar_select %p24, %s23, 0
    %s26 = smul.u32 2, %s25
    %p27 = scmp.lt.s32.totalorder %s26, 1
    %s28 = scalar_select %p27, %s26, 1
    %s29 = smul.addr %s28, 8
    %s30 = scalar_lea.vmem %s1, %s29
    %s31 = sadd.s32 0, 0
    %p32 = scmp.lt.s32.totalorder %s31, 0
    %s33 = scalar_select %p32, %s31, 0
    %s34 = smul.u32 2, %s33
  $region9: #{loss_reconstruction.1} parent=0 // pred_fallthru
    _
  %s35 = sadd.s32 0, 0
  %p36 = scmp.lt.s32.totalorder %s35, 0
  %s37 = scalar_select %p36, %s35, 0
  %s38 = smul.u32 2, %s37
  %p39 = scmp.lt.s32.totalorder %s38, 1
  %s40 = scalar_select %p39, %s38, 1
  %s41 = smul.addr %s40, 8
  %s42 = scalar_lea.vmem %s0, %s41
  %s43 = sadd.s32 0, 0
  %p44 = scmp.lt.s32.totalorder %s43, 0
  %s45 = scalar_select %p44, %s43, 0
  %s46 = smul.u32 2, %s45
  %p47 = scmp.lt.s32.totalorder %s46, 1
  %s48 = scalar_select %p47, %s46, 1
  %s49 = smul.addr %s48, 8
  %s50 = scalar_lea.vmem %s1, %s49
  %s51 = sadd.s32 0, 0
  %p52 = scmp.lt.s32.totalorder %s51, 0
  %s53 = scalar_select %p52, %s51, 0
  %s54 = smul.u32 2, %s53
  %p55 = scmp.lt.s32.totalorder %s54, 1
  %s56 = scalar_select %p55, %s54, 1
  %s57 = smul.addr %s56, 8
  %s58 = scalar_lea.vmem %s0, %s57
  %s59 = sadd.s32 0, 0
  %p60 = scmp.lt.s32.totalorder %s59, 0
  %s61 = scalar_select %p60, %s59, 0
  %s62 = smul.u32 2, %s61
  %s63 = sadd.s32 0, 0
  %p64 = scmp.lt.s32.totalorder %s63, 0
  %s65 = scalar_select %p64, %s63, 0
  %s66 = smul.u32 2, %s65
  %p67 = scmp.lt.s32.totalorder %s66, 1
  %s68 = scalar_select %p67, %s66, 1
  %s69 = smul.addr %s68, 8
  %s70 = scalar_lea.vmem %s1, %s69
  %s71 = sadd.s32 0, 0
  %p72 = scmp.lt.s32.totalorder %s71, 0
  %s73 = scalar_select %p72, %s71, 0
  %s74 = smul.u32 2, %s73
  %p75 = scmp.eq.s32.totalorder 0, 0
  // Predicated region
  $region10: #{loss_reconstruction.1} parent=0 // pred_check
    %p76 = pneg %p75
  $region11: #{loss_reconstruction.1} parent=0 // pred_check_branch
    %78 = sbr.rel (%p76) target = $region13
  $region12: #{loss_reconstruction.1} parent=0 // pred_region
    %79 = vst [vmem:[#allocation2] sm:$0xff] 0.0
  $region13: #{loss_reconstruction.1} parent=0 // pred_fallthru
    _
  %v80 = vld [vmem:[%s58] sm:$0xff]
  %v81 = vld [vmem:[%s58 + $0x8] sm:$0xff]
  %v82 = vld [vmem:[%s70] sm:$0xff]
  %v83 = vld [vmem:[%s70 + $0x8] sm:$0xff]
  %v84 = vsub.f32 %v82, %v80
  %v85 = vsub.f32 %v83, %v81
  %v86 = vmul.f32 %v84, %v84
  %v87 = vmul.f32 %v85, %v85
  %v88 = vld [vmem:[#allocation2] sm:$0xff]
  %v89 = vadd.f32 %v86, %v87
  %v90 = vadd.f32 %v88, %v89
  %91 = vst [vmem:[#allocation2] sm:$0xff] %v90
  // Predicated region
  $region14: #{loss_reconstruction.1} parent=0 // pred_check
    %p92 = pneg %p75
  $region15: #{loss_reconstruction.1} parent=0 // pred_check_branch
    %94 = sbr.rel (%p92) target = $region17
  $region16: #{loss_reconstruction.1} parent=0 // pred_region
    %v95 = vld [vmem:[#allocation2] sm:$0xff]
    %96 = vst [vmem:[%s2] sm:$0xff] %v95
  $region17: #{loss_reconstruction.1} parent=0 // pred_fallthru
    _
  // Predicated region
  $region18: #{loss_reconstruction.1} parent=0 // pred_check
    _
  $region19: #{loss_reconstruction.1} parent=0 // pred_check_branch
    %98 = sbr.rel (0) target = $region21
  $region20: #{loss_reconstruction.1} parent=0 // pred_region
    _
  $region21: #{loss_reconstruction.1} parent=0 // pred_fallthru
    _
  // Predicated region
  $region22: #{loss_reconstruction.1} parent=0 // pred_check
    _
  $region23: #{loss_reconstruction.1} parent=0 // pred_check_branch
    %100 = sbr.rel (0) target = $region25
  $region24: #{loss_reconstruction.1} parent=0 // pred_region
    _
  $region25: #{loss_reconstruction.1} parent=0 // pred_fallthru
    _

</llo_original>
